<compile_context>
chip_gen: v5e
topology: v5e:2x2
jax: 0.10.0
libtpu: 0.0.40
codegen_flags: <defaults>
</compile_context>

<pallas_src>
import functools

import jax
import jax.numpy as jnp
from jax.experimental import pallas as pl
from jax.experimental.pallas import tpu as pltpu

EPS = 1e-5
IN_FEATURES = 5
OUT_FEATURES = 2


# ---------------------------------------------------------------------------
# Kernel
# ---------------------------------------------------------------------------
def make_kernel(num_hidden):
    """Build the MLP kernel for `num_hidden` hidden (Linear+ReLU+BN) layers."""

    def kernel(x_ref, w_ref, v_ref, o_ref):
        # x_ref: (B, P)        lane-dense, zero-padded input
        # w_ref: (L, P, P)     zero-padded weight slab, layer l = w_ref[l]
        # v_ref: (R, P)        row slab: [b1,g1,be1, b2,g2,be2, ..., b_last]
        # o_ref: (B, P)        lane-dense output slab (cols >= 2 are garbage/0)
        B = x_ref.shape[0]
        inv_b = jnp.float32(1.0 / B)

        h = x_ref[...].astype(jnp.float32)

        row = 0
        for li in range(num_hidden):
            b = v_ref[row:row + 1, :]
            g = v_ref[row + 1:row + 2, :]
            be = v_ref[row + 2:row + 3, :]
            row += 3

            # Linear (MXU) + ReLU
            h = jnp.dot(h, w_ref[li], preferred_element_type=jnp.float32) + b
            h = jnp.maximum(h, 0.0)

            # BatchNorm1d, single-pass stats: var = E[h^2] - E[h]^2 (biased)
            mean = jnp.sum(h, axis=0, keepdims=True) * inv_b
            msq = jnp.sum(h * h, axis=0, keepdims=True) * inv_b
            var = jnp.maximum(msq - mean * mean, 0.0)
            h = (h - mean) * jax.lax.rsqrt(var + EPS) * g + be

        # Final Linear (no activation / BN)
        b_last = v_ref[row:row + 1, :]
        o_ref[...] = (jnp.dot(h, w_ref[num_hidden],
                              preferred_element_type=jnp.float32)
                      + b_last).astype(o_ref.dtype)

    return kernel


# ---------------------------------------------------------------------------
# Host-side packing + wrapper
# ---------------------------------------------------------------------------
def _padded_width(dims):
    return ((max(dims) + 127) // 128) * 128


def pack_params(params, neurons):
    """Pack 14 natural-shape params into (w_slab, v_slab); done once at init."""
    dims = [IN_FEATURES] + list(neurons) + [OUT_FEATURES]
    nl = len(dims) - 1                      # number of Linear layers
    P = _padded_width(dims)
    nvec = 3 * (nl - 1) + 1                 # b,g,be per hidden + final bias
    nrows = ((nvec + 7) // 8) * 8

    w_slab = jnp.zeros((nl, P, P), jnp.float32)
    v_slab = jnp.zeros((nrows, P), jnp.float32)

    it = iter(params)
    row = 0
    for li, (din, dout) in enumerate(zip(dims[:-1], dims[1:])):
        w = next(it)                        # (din, dout)
        b = next(it)                        # (1, dout)
        w_slab = w_slab.at[li, :din, :dout].set(w)
        v_slab = v_slab.at[row, :dout].set(b.reshape(-1)); row += 1
        if li < nl - 1:
            g = next(it); be = next(it)
            v_slab = v_slab.at[row, :dout].set(g.reshape(-1)); row += 1
            v_slab = v_slab.at[row, :dout].set(be.reshape(-1)); row += 1
    return w_slab, v_slab


@functools.partial(jax.jit, static_argnames=("num_hidden",))
def my_model1_forward(x, w_slab, v_slab, *, num_hidden):
    """x: (B, 5) float32. Returns (B, 2) float32."""
    B = x.shape[0]
    P = w_slab.shape[-1]

    # Lane-dense, zero-padded input (padding columns provably stay 0).
    x_pad = jnp.zeros((B, P), jnp.float32).at[:, :x.shape[1]].set(x)

    vmem = pl.BlockSpec(memory_space=pltpu.MemorySpace.VMEM)
    out_pad = pl.pallas_call(
        make_kernel(num_hidden),
        out_shape=jax.ShapeDtypeStruct((B, P), jnp.float32),
        in_specs=[vmem, vmem, vmem],
        out_specs=vmem,
        compiler_params=pltpu.CompilerParams(vmem_limit_bytes=32 * 1024 * 1024),
    )(x_pad, w_slab, v_slab)
    return out_pad[:, :OUT_FEATURES]


# ---------------------------------------------------------------------------
# Params + pure-JAX reference
# ---------------------------------------------------------------------------
def init_params(key, neurons):
    """Linear weights stored (in, out); biases (1, out); BN gamma=1, beta=0."""
    dims = [IN_FEATURES] + list(neurons) + [OUT_FEATURES]
    params = []
    ks = jax.random.split(key, len(dims) - 1)
    for li, (din, dout) in enumerate(zip(dims[:-1], dims[1:])):
        bound = 1.0 / jnp.sqrt(din)
        kw, kb = jax.random.split(ks[li])
        w = jax.random.uniform(kw, (din, dout), jnp.float32, -bound, bound)
        b = jax.random.uniform(kb, (1, dout), jnp.float32, -bound, bound)
        params.extend([w, b])
        if li < len(dims) - 2:
            params.extend([jnp.ones((1, dout), jnp.float32),
                           jnp.zeros((1, dout), jnp.float32)])
    return params


def reference_forward(x, params):
    (w1, b1, g1, be1, w2, b2, g2, be2, w3, b3, g3, be3, w4, b4) = params

    def bn(h, g, be):
        m = jnp.mean(h, axis=0, keepdims=True)
        v = jnp.mean((h - m) ** 2, axis=0, keepdims=True)
        return (h - m) / jnp.sqrt(v + EPS) * g + be

    h = jnp.maximum(x @ w1 + b1, 0.0); h = bn(h, g1, be1)
    h = jnp.maximum(h @ w2 + b2, 0.0); h = bn(h, g2, be2)
    h = jnp.maximum(h @ w3 + b3, 0.0); h = bn(h, g3, be3)
    return h @ w4 + b4


# ---------------------------------------------------------------------------
if __name__ == "__main__":
    neurons = [32, 64, 32]          # MyModel1(neurons=[32, 64, 32])
    batch = 8

    key = jax.random.PRNGKey(0)
    kx, kp = jax.random.split(key)
    x = jax.random.normal(kx, (batch, IN_FEATURES), jnp.float32)

    params = init_params(kp, neurons)
    w_slab, v_slab = pack_params(params, neurons)

    out = my_model1_forward(x, w_slab, v_slab, num_hidden=len(neurons))
    out = jax.block_until_ready(out)

    ref = reference_forward(x, params)
    assert out.shape == (batch, OUT_FEATURES)
    assert jnp.allclose(out, ref, atol=1e-4, rtol=1e-4)

    print("KERNEL_OK")
</pallas_src>

<mosaic_0001>
module attributes {stable_mosaic.version = 11 : i64} {
  func.func @kernel(%arg0: memref<8x128xf32, #tpu.memory_space<vmem>>, %arg1: memref<4x128x128xf32, #tpu.memory_space<vmem>>, %arg2: memref<16x128xf32, #tpu.memory_space<vmem>>, %arg3: memref<8x128xf32, #tpu.memory_space<vmem>>) attributes {dimension_semantics = [], scalar_prefetch = 0 : i64, scratch_operands = 0 : i64, tpu.core_type = #tpu.core_type<tc>} {
    %c0 = arith.constant 0 : index
    %c0_0 = arith.constant 0 : index
    %0 = vector.load %arg0[%c0, %c0_0] : memref<8x128xf32, #tpu.memory_space<vmem>>, vector<8x128xf32>
    %c0_1 = arith.constant 0 : index
    %c0_2 = arith.constant 0 : index
    %1 = vector.load %arg2[%c0_1, %c0_2] : memref<16x128xf32, #tpu.memory_space<vmem>>, vector<1x128xf32>
    %c1 = arith.constant 1 : index
    %c0_3 = arith.constant 0 : index
    %2 = vector.load %arg2[%c1, %c0_3] : memref<16x128xf32, #tpu.memory_space<vmem>>, vector<1x128xf32>
    %c2 = arith.constant 2 : index
    %c0_4 = arith.constant 0 : index
    %3 = vector.load %arg2[%c2, %c0_4] : memref<16x128xf32, #tpu.memory_space<vmem>>, vector<1x128xf32>
    %c0_5 = arith.constant 0 : index
    %c0_6 = arith.constant 0 : index
    %c0_7 = arith.constant 0 : index
    %4 = vector.load %arg1[%c0_5, %c0_6, %c0_7] : memref<4x128x128xf32, #tpu.memory_space<vmem>>, vector<1x128x128xf32>
    %5 = vector.shape_cast %4 : vector<1x128x128xf32> to vector<128x128xf32>
    %cst = arith.constant dense<0.000000e+00> : vector<8x128xf32>
    %6 = tpu.matmul %0, %5, %cst {dimension_numbers = #tpu.dot_dimension_numbers<[1], [0], [0], [1], [0, 0, 1, 1], [], []>} : vector<8x128xf32>, vector<128x128xf32>, vector<8x128xf32> -> vector<8x128xf32>
    %7 = vector.broadcast %1 : vector<1x128xf32> to vector<8x128xf32>
    %8 = arith.addf %6, %7 : vector<8x128xf32>
    %cst_8 = arith.constant 0.000000e+00 : f32
    %9 = vector.broadcast %cst_8 : f32 to vector<8x128xf32>
    %10 = arith.maximumf %8, %9 : vector<8x128xf32>
    %cst_9 = arith.constant dense<0.000000e+00> : vector<128xf32>
    %11 = vector.multi_reduction <add>, %10, %cst_9 [0] : vector<8x128xf32> to vector<128xf32>
    %12 = vector.shape_cast %11 : vector<128xf32> to vector<1x128xf32>
    %cst_10 = arith.constant 1.250000e-01 : f32
    %13 = vector.broadcast %cst_10 : f32 to vector<1x128xf32>
    %14 = arith.mulf %12, %13 : vector<1x128xf32>
    %15 = arith.mulf %10, %10 : vector<8x128xf32>
    %cst_11 = arith.constant dense<0.000000e+00> : vector<128xf32>
    %16 = vector.multi_reduction <add>, %15, %cst_11 [0] : vector<8x128xf32> to vector<128xf32>
    %17 = vector.shape_cast %16 : vector<128xf32> to vector<1x128xf32>
    %cst_12 = arith.constant 1.250000e-01 : f32
    %18 = vector.broadcast %cst_12 : f32 to vector<1x128xf32>
    %19 = arith.mulf %17, %18 : vector<1x128xf32>
    %20 = arith.mulf %14, %14 : vector<1x128xf32>
    %21 = arith.subf %19, %20 : vector<1x128xf32>
    %cst_13 = arith.constant 0.000000e+00 : f32
    %22 = vector.broadcast %cst_13 : f32 to vector<1x128xf32>
    %23 = arith.maximumf %21, %22 : vector<1x128xf32>
    %24 = vector.broadcast %14 : vector<1x128xf32> to vector<8x128xf32>
    %25 = arith.subf %10, %24 : vector<8x128xf32>
    %cst_14 = arith.constant 9.99999974E-6 : f32
    %26 = vector.broadcast %cst_14 : f32 to vector<1x128xf32>
    %27 = arith.addf %23, %26 : vector<1x128xf32>
    %28 = math.rsqrt %27 : vector<1x128xf32>
    %29 = vector.broadcast %28 : vector<1x128xf32> to vector<8x128xf32>
    %30 = arith.mulf %25, %29 : vector<8x128xf32>
    %31 = vector.broadcast %2 : vector<1x128xf32> to vector<8x128xf32>
    %32 = arith.mulf %30, %31 : vector<8x128xf32>
    %33 = vector.broadcast %3 : vector<1x128xf32> to vector<8x128xf32>
    %34 = arith.addf %32, %33 : vector<8x128xf32>
    %c3 = arith.constant 3 : index
    %c0_15 = arith.constant 0 : index
    %35 = vector.load %arg2[%c3, %c0_15] : memref<16x128xf32, #tpu.memory_space<vmem>>, vector<1x128xf32>
    %c4 = arith.constant 4 : index
    %c0_16 = arith.constant 0 : index
    %36 = vector.load %arg2[%c4, %c0_16] : memref<16x128xf32, #tpu.memory_space<vmem>>, vector<1x128xf32>
    %c5 = arith.constant 5 : index
    %c0_17 = arith.constant 0 : index
    %37 = vector.load %arg2[%c5, %c0_17] : memref<16x128xf32, #tpu.memory_space<vmem>>, vector<1x128xf32>
    %c1_18 = arith.constant 1 : index
    %c0_19 = arith.constant 0 : index
    %c0_20 = arith.constant 0 : index
    %38 = vector.load %arg1[%c1_18, %c0_19, %c0_20] : memref<4x128x128xf32, #tpu.memory_space<vmem>>, vector<1x128x128xf32>
    %39 = vector.shape_cast %38 : vector<1x128x128xf32> to vector<128x128xf32>
    %cst_21 = arith.constant dense<0.000000e+00> : vector<8x128xf32>
    %40 = tpu.matmul %34, %39, %cst_21 {dimension_numbers = #tpu.dot_dimension_numbers<[1], [0], [0], [1], [0, 0, 1, 1], [], []>} : vector<8x128xf32>, vector<128x128xf32>, vector<8x128xf32> -> vector<8x128xf32>
    %41 = vector.broadcast %35 : vector<1x128xf32> to vector<8x128xf32>
    %42 = arith.addf %40, %41 : vector<8x128xf32>
    %cst_22 = arith.constant 0.000000e+00 : f32
    %43 = vector.broadcast %cst_22 : f32 to vector<8x128xf32>
    %44 = arith.maximumf %42, %43 : vector<8x128xf32>
    %cst_23 = arith.constant dense<0.000000e+00> : vector<128xf32>
    %45 = vector.multi_reduction <add>, %44, %cst_23 [0] : vector<8x128xf32> to vector<128xf32>
    %46 = vector.shape_cast %45 : vector<128xf32> to vector<1x128xf32>
    %cst_24 = arith.constant 1.250000e-01 : f32
    %47 = vector.broadcast %cst_24 : f32 to vector<1x128xf32>
    %48 = arith.mulf %46, %47 : vector<1x128xf32>
    %49 = arith.mulf %44, %44 : vector<8x128xf32>
    %cst_25 = arith.constant dense<0.000000e+00> : vector<128xf32>
    %50 = vector.multi_reduction <add>, %49, %cst_25 [0] : vector<8x128xf32> to vector<128xf32>
    %51 = vector.shape_cast %50 : vector<128xf32> to vector<1x128xf32>
    %cst_26 = arith.constant 1.250000e-01 : f32
    %52 = vector.broadcast %cst_26 : f32 to vector<1x128xf32>
    %53 = arith.mulf %51, %52 : vector<1x128xf32>
    %54 = arith.mulf %48, %48 : vector<1x128xf32>
    %55 = arith.subf %53, %54 : vector<1x128xf32>
    %cst_27 = arith.constant 0.000000e+00 : f32
    %56 = vector.broadcast %cst_27 : f32 to vector<1x128xf32>
    %57 = arith.maximumf %55, %56 : vector<1x128xf32>
    %58 = vector.broadcast %48 : vector<1x128xf32> to vector<8x128xf32>
    %59 = arith.subf %44, %58 : vector<8x128xf32>
    %cst_28 = arith.constant 9.99999974E-6 : f32
    %60 = vector.broadcast %cst_28 : f32 to vector<1x128xf32>
    %61 = arith.addf %57, %60 : vector<1x128xf32>
    %62 = math.rsqrt %61 : vector<1x128xf32>
    %63 = vector.broadcast %62 : vector<1x128xf32> to vector<8x128xf32>
    %64 = arith.mulf %59, %63 : vector<8x128xf32>
    %65 = vector.broadcast %36 : vector<1x128xf32> to vector<8x128xf32>
    %66 = arith.mulf %64, %65 : vector<8x128xf32>
    %67 = vector.broadcast %37 : vector<1x128xf32> to vector<8x128xf32>
    %68 = arith.addf %66, %67 : vector<8x128xf32>
    %c6 = arith.constant 6 : index
    %c0_29 = arith.constant 0 : index
    %69 = vector.load %arg2[%c6, %c0_29] : memref<16x128xf32, #tpu.memory_space<vmem>>, vector<1x128xf32>
    %c7 = arith.constant 7 : index
    %c0_30 = arith.constant 0 : index
    %70 = vector.load %arg2[%c7, %c0_30] : memref<16x128xf32, #tpu.memory_space<vmem>>, vector<1x128xf32>
    %c8 = arith.constant 8 : index
    %c0_31 = arith.constant 0 : index
    %71 = vector.load %arg2[%c8, %c0_31] : memref<16x128xf32, #tpu.memory_space<vmem>>, vector<1x128xf32>
    %c2_32 = arith.constant 2 : index
    %c0_33 = arith.constant 0 : index
    %c0_34 = arith.constant 0 : index
    %72 = vector.load %arg1[%c2_32, %c0_33, %c0_34] : memref<4x128x128xf32, #tpu.memory_space<vmem>>, vector<1x128x128xf32>
    %73 = vector.shape_cast %72 : vector<1x128x128xf32> to vector<128x128xf32>
    %cst_35 = arith.constant dense<0.000000e+00> : vector<8x128xf32>
    %74 = tpu.matmul %68, %73, %cst_35 {dimension_numbers = #tpu.dot_dimension_numbers<[1], [0], [0], [1], [0, 0, 1, 1], [], []>} : vector<8x128xf32>, vector<128x128xf32>, vector<8x128xf32> -> vector<8x128xf32>
    %75 = vector.broadcast %69 : vector<1x128xf32> to vector<8x128xf32>
    %76 = arith.addf %74, %75 : vector<8x128xf32>
    %cst_36 = arith.constant 0.000000e+00 : f32
    %77 = vector.broadcast %cst_36 : f32 to vector<8x128xf32>
    %78 = arith.maximumf %76, %77 : vector<8x128xf32>
    %cst_37 = arith.constant dense<0.000000e+00> : vector<128xf32>
    %79 = vector.multi_reduction <add>, %78, %cst_37 [0] : vector<8x128xf32> to vector<128xf32>
    %80 = vector.shape_cast %79 : vector<128xf32> to vector<1x128xf32>
    %cst_38 = arith.constant 1.250000e-01 : f32
    %81 = vector.broadcast %cst_38 : f32 to vector<1x128xf32>
    %82 = arith.mulf %80, %81 : vector<1x128xf32>
    %83 = arith.mulf %78, %78 : vector<8x128xf32>
    %cst_39 = arith.constant dense<0.000000e+00> : vector<128xf32>
    %84 = vector.multi_reduction <add>, %83, %cst_39 [0] : vector<8x128xf32> to vector<128xf32>
    %85 = vector.shape_cast %84 : vector<128xf32> to vector<1x128xf32>
    %cst_40 = arith.constant 1.250000e-01 : f32
    %86 = vector.broadcast %cst_40 : f32 to vector<1x128xf32>
    %87 = arith.mulf %85, %86 : vector<1x128xf32>
    %88 = arith.mulf %82, %82 : vector<1x128xf32>
    %89 = arith.subf %87, %88 : vector<1x128xf32>
    %cst_41 = arith.constant 0.000000e+00 : f32
    %90 = vector.broadcast %cst_41 : f32 to vector<1x128xf32>
    %91 = arith.maximumf %89, %90 : vector<1x128xf32>
    %92 = vector.broadcast %82 : vector<1x128xf32> to vector<8x128xf32>
    %93 = arith.subf %78, %92 : vector<8x128xf32>
    %cst_42 = arith.constant 9.99999974E-6 : f32
    %94 = vector.broadcast %cst_42 : f32 to vector<1x128xf32>
    %95 = arith.addf %91, %94 : vector<1x128xf32>
    %96 = math.rsqrt %95 : vector<1x128xf32>
    %97 = vector.broadcast %96 : vector<1x128xf32> to vector<8x128xf32>
    %98 = arith.mulf %93, %97 : vector<8x128xf32>
    %99 = vector.broadcast %70 : vector<1x128xf32> to vector<8x128xf32>
    %100 = arith.mulf %98, %99 : vector<8x128xf32>
    %101 = vector.broadcast %71 : vector<1x128xf32> to vector<8x128xf32>
    %102 = arith.addf %100, %101 : vector<8x128xf32>
    %c9 = arith.constant 9 : index
    %c0_43 = arith.constant 0 : index
    %103 = vector.load %arg2[%c9, %c0_43] : memref<16x128xf32, #tpu.memory_space<vmem>>, vector<1x128xf32>
    %c3_44 = arith.constant 3 : index
    %c0_45 = arith.constant 0 : index
    %c0_46 = arith.constant 0 : index
    %104 = vector.load %arg1[%c3_44, %c0_45, %c0_46] : memref<4x128x128xf32, #tpu.memory_space<vmem>>, vector<1x128x128xf32>
    %105 = vector.shape_cast %104 : vector<1x128x128xf32> to vector<128x128xf32>
    %cst_47 = arith.constant dense<0.000000e+00> : vector<8x128xf32>
    %106 = tpu.matmul %102, %105, %cst_47 {dimension_numbers = #tpu.dot_dimension_numbers<[1], [0], [0], [1], [0, 0, 1, 1], [], []>} : vector<8x128xf32>, vector<128x128xf32>, vector<8x128xf32> -> vector<8x128xf32>
    %107 = vector.broadcast %103 : vector<1x128xf32> to vector<8x128xf32>
    %108 = arith.addf %106, %107 : vector<8x128xf32>
    %c0_48 = arith.constant 0 : index
    %c0_49 = arith.constant 0 : index
    %109 = vector.load %arg3[%c0_48, %c0_49] : memref<8x128xf32, #tpu.memory_space<vmem>>, vector<8x128xf32>
    tpu.vector_store %arg3[%c0_48, %c0_49], %108 {strides = array<i32>} : memref<8x128xf32, #tpu.memory_space<vmem>>, vector<8x128xf32>,
    return
  }
}

</mosaic_0001>

<llo_original>
// kernel: my_model1_forward.1
$region0: #{my_model1_forward.1}
  #allocation0 [shape = 'u32[]', space=smem, size = 0x4, offset = 0x4, fixed_abs, tag = 'smem constant byte address 0x4 - core index']
  #allocation1 [shape = 'u32[72,128]{1,0:T(1,128)}', space=vmem, size = 0x9000, scoped, tag = 'internal scratch']
  %s0 = inlined_call_operand.vmem [shape: f32[8,128], index: 0, kind: input, shape index: {}]
  %s1 = inlined_call_operand.hbm [shape: f32[4,128,128], index: 1, kind: input, shape index: {}]
  %s2 = inlined_call_operand.vmem [shape: f32[16,128], index: 2, kind: input, shape index: {}]
  %s3 = inlined_call_operand.vmem [shape: f32[8,128], index: 3, kind: output, shape index: {}]
  %s4 = sld [smem:[#allocation0]]
  $region26: #{my_model1_forward.1} parent=0
    _
  %s6 = ssub.s32 1, %s4
  %s7 = scalar_select 0, %s6, %s4
  $region1: #{my_model1_forward.1} parent=0
    #allocation2 [shape = 'u8[262144]{0}', space=vmem, size = 0x40000, scoped, tag = 'input window, operand 1, single buffered']
    #allocation3 [shape = 's32[1]{0}', space=sflag, size = 0x4, scoped, tag = 'scoped memory for my_model1_forward.1']
    %8 = vsyncpa [#allocation3], 0
    // Predicated region
    $region2: #{my_model1_forward.1} parent=1 // pred_check
      _
    $region3: #{my_model1_forward.1} parent=1 // pred_check_branch
      %10 = sbr.rel (0) target = $region5
    $region4: #{my_model1_forward.1} parent=1 // pred_region
      _
    $region5: #{my_model1_forward.1} parent=1 // pred_fallthru
      _
    // Predicated region
    $region6: #{my_model1_forward.1} parent=1 // pred_check
      _
    $region7: #{my_model1_forward.1} parent=1 // pred_check_branch
      %12 = sbr.rel (0) target = $region9
    $region8: #{my_model1_forward.1} parent=1 // pred_region
      %14 = vsyncadd [#allocation3], 0
      %s15 = sshll.u32 %s1, 4
      %s16 = int_to_ptr.hbm [resolvable:$true] %s15
      %s17 = sshll.u32 [#allocation2], 4
      %s18 = int_to_ptr.vmem [resolvable:$true] %s17
      %23 = dma.hbm_to_vmem [thread:$0]  %s16, 8192, %s18, [#allocation3], 128, 128, 8
    $region9: #{my_model1_forward.1} parent=1 // pred_fallthru
      _
    // Predicated region
    $region10: #{my_model1_forward.1} parent=1 // pred_check
      _
    $region11: #{my_model1_forward.1} parent=1 // pred_check_branch
      %25 = sbr.rel (0) target = $region13
    $region12: #{my_model1_forward.1} parent=1 // pred_region
      _
    $region13: #{my_model1_forward.1} parent=1 // pred_fallthru
      _
    // Predicated region
    $region14: #{my_model1_forward.1} parent=1 // pred_check
      _
    $region15: #{my_model1_forward.1} parent=1 // pred_check_branch
      %27 = sbr.rel (0) target = $region17
    $region16: #{my_model1_forward.1} parent=1 // pred_region
      %29 = dma.done [#allocation3], 8192
    $region17: #{my_model1_forward.1} parent=1 // pred_fallthru
      _
    %v30 = vld [vmem:[%s0] sm:$0xff]
    %v31 = vld [vmem:[%s2] sm:$0x1]
    %v32 = vld [vmem:[%s2 + $0x1] sm:$0x1]
    %v33 = vld [vmem:[%s2 + $0x2] sm:$0x1]
    %v34 = vld [vmem:[#allocation2] sm:$0xff]
    %v35 = vld [vmem:[#allocation2 + $0x8] sm:$0xff]
    %v36 = vld [vmem:[#allocation2 + $0x10] sm:$0xff]
    %v37 = vld [vmem:[#allocation2 + $0x18] sm:$0xff]
    %v38 = vld [vmem:[#allocation2 + $0x20] sm:$0xff]
    %v39 = vld [vmem:[#allocation2 + $0x28] sm:$0xff]
    %v40 = vld [vmem:[#allocation2 + $0x30] sm:$0xff]
    %v41 = vld [vmem:[#allocation2 + $0x38] sm:$0xff]
    %v42 = vld [vmem:[#allocation2 + $0x40] sm:$0xff]
    %v43 = vld [vmem:[#allocation2 + $0x48] sm:$0xff]
    %v44 = vld [vmem:[#allocation2 + $0x50] sm:$0xff]
    %v45 = vld [vmem:[#allocation2 + $0x58] sm:$0xff]
    %v46 = vld [vmem:[#allocation2 + $0x60] sm:$0xff]
    %v47 = vld [vmem:[#allocation2 + $0x68] sm:$0xff]
    %v48 = vld [vmem:[#allocation2 + $0x70] sm:$0xff]
    %v49 = vld [vmem:[#allocation2 + $0x78] sm:$0xff]
    %v50 = vperm.slane %v31, 0
    %51 = vmatpush.msra.mxu0 %v49
    %52 = vmatpush.msra.mxu0 %v48
    %53 = vmatpush.msra.mxu0 %v47
    %54 = vmatpush.msra.mxu0 %v46
    %55 = vmatpush.msra.mxu0 %v45
    %56 = vmatpush.msra.mxu0 %v44
    %57 = vmatpush.msra.mxu0 %v43
    %58 = vmatpush.msra.mxu0 %v42
    %59 = vmatpush.msra.mxu0 %v41
    %60 = vmatpush.msra.mxu0 %v40
    %61 = vmatpush.msra.mxu0 %v39
    %62 = vmatpush.msra.mxu0 %v38
    %63 = vmatpush.msra.mxu0 %v37
    %64 = vmatpush.msra.mxu0 %v36
    %65 = vmatpush.msra.mxu0 %v35
    %66 = vmatpush.msra.mxu0 %v34
    %67 = vmatmul.f32.gmra.mxu0 %v30
    %v68 = vpop.f32.mrf.mxu0
    %v69 = vadd.f32 %v50, %v68
    %70 = vdwg.mxu0
    %v71 = vmax.f32 %v69, 0.0
    %v72 = vrot.slane %v71, 4
    %v73 = vadd.f32 %v71, %v72
    %v74 = vrot.slane %v73, 2
    %v75 = vadd.f32 %v73, %v74
    %v76 = vrot.slane %v75, 1
    %v77 = vadd.f32 %v75, %v76
    %v78 = vmul.f32 %v77, 0.125
    %v79 = vmul.f32 %v71, %v71
    %v80 = vrot.slane %v79, 4
    %v81 = vadd.f32 %v79, %v80
    %v82 = vrot.slane %v81, 2
    %v83 = vadd.f32 %v81, %v82
    %v84 = vrot.slane %v83, 1
    %v85 = vadd.f32 %v83, %v84
    %v86 = vmul.f32 %v85, 0.125
    %v87 = vmul.f32 %v78, %v78
    %v88 = vsub.f32 %v86, %v87
    %v89 = vmax.f32 %v88, 0.0
    %v90 = vsub.f32 %v71, %v78
    %v91 = vadd.f32 %v89, 1e-05
    %v92 = vrsqrt.pop %v91
    %v93 = vmul.f32 %v92, %v91
    %v94 = vmul.f32 %v93, %v92
    %v95 = vmul.f32 0.5, %v94
    %v96 = vsub.f32 1.5, %v95
    %v97 = vmul.f32 %v92, %v96
    %vm98 = vweird.f32 %v91
    %vm99 = vweird.f32 %v92
    %vm100 = vmor %vm98, %vm99
    %v101 = vsel %vm100, %v92, %v97
    %v102 = vmul.f32 %v90, %v101
    %v103 = vperm.slane %v32, 0
    %v104 = vmul.f32 %v102, %v103
    %v105 = vperm.slane %v33, 0
    %v106 = vadd.f32 %v104, %v105
    %v107 = vld [vmem:[%s2 + $0x3] sm:$0x1]
    %v108 = vld [vmem:[%s2 + $0x4] sm:$0x1]
    %v109 = vld [vmem:[%s2 + $0x5] sm:$0x1]
    %s110 = scalar_lea.vmem [#allocation2], 128
    %v111 = vld [vmem:[%s110] sm:$0xff]
    %v112 = vld [vmem:[%s110 + $0x8] sm:$0xff]
    %v113 = vld [vmem:[%s110 + $0x10] sm:$0xff]
    %v114 = vld [vmem:[%s110 + $0x18] sm:$0xff]
    %v115 = vld [vmem:[%s110 + $0x20] sm:$0xff]
    %v116 = vld [vmem:[%s110 + $0x28] sm:$0xff]
    %v117 = vld [vmem:[%s110 + $0x30] sm:$0xff]
    %v118 = vld [vmem:[%s110 + $0x38] sm:$0xff]
    %v119 = vld [vmem:[%s110 + $0x40] sm:$0xff]
    %v120 = vld [vmem:[%s110 + $0x48] sm:$0xff]
    %v121 = vld [vmem:[%s110 + $0x50] sm:$0xff]
    %v122 = vld [vmem:[%s110 + $0x58] sm:$0xff]
    %v123 = vld [vmem:[%s110 + $0x60] sm:$0xff]
    %v124 = vld [vmem:[%s110 + $0x68] sm:$0xff]
    %v125 = vld [vmem:[%s110 + $0x70] sm:$0xff]
    %v126 = vld [vmem:[%s110 + $0x78] sm:$0xff]
    %v127 = vperm.slane %v107, 0
    %128 = vmatpush.msra.mxu0 %v126
    %129 = vmatpush.msra.mxu0 %v125
    %130 = vmatpush.msra.mxu0 %v124
    %131 = vmatpush.msra.mxu0 %v123
    %132 = vmatpush.msra.mxu0 %v122
    %133 = vmatpush.msra.mxu0 %v121
    %134 = vmatpush.msra.mxu0 %v120
    %135 = vmatpush.msra.mxu0 %v119
    %136 = vmatpush.msra.mxu0 %v118
    %137 = vmatpush.msra.mxu0 %v117
    %138 = vmatpush.msra.mxu0 %v116
    %139 = vmatpush.msra.mxu0 %v115
    %140 = vmatpush.msra.mxu0 %v114
    %141 = vmatpush.msra.mxu0 %v113
    %142 = vmatpush.msra.mxu0 %v112
    %143 = vmatpush.msra.mxu0 %v111
    %144 = vmatmul.f32.gmra.mxu0 %v106
    %v145 = vpop.f32.mrf.mxu0
    %v146 = vadd.f32 %v127, %v145
    %147 = vdwg.mxu0
    %v148 = vmax.f32 %v146, 0.0
    %v149 = vrot.slane %v148, 4
    %v150 = vadd.f32 %v148, %v149
    %v151 = vrot.slane %v150, 2
    %v152 = vadd.f32 %v150, %v151
    %v153 = vrot.slane %v152, 1
    %v154 = vadd.f32 %v152, %v153
    %v155 = vmul.f32 %v154, 0.125
    %v156 = vmul.f32 %v148, %v148
    %v157 = vrot.slane %v156, 4
    %v158 = vadd.f32 %v156, %v157
    %v159 = vrot.slane %v158, 2
    %v160 = vadd.f32 %v158, %v159
    %v161 = vrot.slane %v160, 1
    %v162 = vadd.f32 %v160, %v161
    %v163 = vmul.f32 %v162, 0.125
    %v164 = vmul.f32 %v155, %v155
    %v165 = vsub.f32 %v163, %v164
    %v166 = vmax.f32 %v165, 0.0
    %v167 = vsub.f32 %v148, %v155
    %v168 = vadd.f32 %v166, 1e-05
    %v169 = vrsqrt.pop %v168
    %v170 = vmul.f32 %v169, %v168
    %v171 = vmul.f32 %v170, %v169
    %v172 = vmul.f32 0.5, %v171
    %v173 = vsub.f32 1.5, %v172
    %v174 = vmul.f32 %v169, %v173
    %vm175 = vweird.f32 %v168
    %vm176 = vweird.f32 %v169
    %vm177 = vmor %vm175, %vm176
    %v178 = vsel %vm177, %v169, %v174
    %v179 = vmul.f32 %v167, %v178
    %v180 = vperm.slane %v108, 0
    %v181 = vmul.f32 %v179, %v180
    %v182 = vperm.slane %v109, 0
    %v183 = vadd.f32 %v181, %v182
    %v184 = vld [vmem:[%s2 + $0x6] sm:$0x1]
    %v185 = vld [vmem:[%s2 + $0x7] sm:$0x1]
    %v186 = vld [vmem:[%s2 + $0x8] sm:$0x1]
    %s187 = scalar_lea.vmem [#allocation2], 256
    %v188 = vld [vmem:[%s187] sm:$0xff]
    %v189 = vld [vmem:[%s187 + $0x8] sm:$0xff]
    %v190 = vld [vmem:[%s187 + $0x10] sm:$0xff]
    %v191 = vld [vmem:[%s187 + $0x18] sm:$0xff]
    %v192 = vld [vmem:[%s187 + $0x20] sm:$0xff]
    %v193 = vld [vmem:[%s187 + $0x28] sm:$0xff]
    %v194 = vld [vmem:[%s187 + $0x30] sm:$0xff]
    %v195 = vld [vmem:[%s187 + $0x38] sm:$0xff]
    %v196 = vld [vmem:[%s187 + $0x40] sm:$0xff]
    %v197 = vld [vmem:[%s187 + $0x48] sm:$0xff]
    %v198 = vld [vmem:[%s187 + $0x50] sm:$0xff]
    %v199 = vld [vmem:[%s187 + $0x58] sm:$0xff]
    %v200 = vld [vmem:[%s187 + $0x60] sm:$0xff]
    %v201 = vld [vmem:[%s187 + $0x68] sm:$0xff]
    %v202 = vld [vmem:[%s187 + $0x70] sm:$0xff]
    %v203 = vld [vmem:[%s187 + $0x78] sm:$0xff]
    %v204 = vperm.slane %v184, 0
    %205 = vmatpush.msra.mxu0 %v203
    %206 = vmatpush.msra.mxu0 %v202
    %207 = vmatpush.msra.mxu0 %v201
    %208 = vmatpush.msra.mxu0 %v200
    %209 = vmatpush.msra.mxu0 %v199
    %210 = vmatpush.msra.mxu0 %v198
    %211 = vmatpush.msra.mxu0 %v197
    %212 = vmatpush.msra.mxu0 %v196
    %213 = vmatpush.msra.mxu0 %v195
    %214 = vmatpush.msra.mxu0 %v194
    %215 = vmatpush.msra.mxu0 %v193
    %216 = vmatpush.msra.mxu0 %v192
    %217 = vmatpush.msra.mxu0 %v191
    %218 = vmatpush.msra.mxu0 %v190
    %219 = vmatpush.msra.mxu0 %v189
    %220 = vmatpush.msra.mxu0 %v188
    %221 = vmatmul.f32.gmra.mxu0 %v183
    %v222 = vpop.f32.mrf.mxu0
    %v223 = vadd.f32 %v204, %v222
    %224 = vdwg.mxu0
    %v225 = vmax.f32 %v223, 0.0
    %v226 = vrot.slane %v225, 4
    %v227 = vadd.f32 %v225, %v226
    %v228 = vrot.slane %v227, 2
    %v229 = vadd.f32 %v227, %v228
    %v230 = vrot.slane %v229, 1
    %v231 = vadd.f32 %v229, %v230
    %v232 = vmul.f32 %v231, 0.125
    %v233 = vmul.f32 %v225, %v225
    %v234 = vrot.slane %v233, 4
    %v235 = vadd.f32 %v233, %v234
    %v236 = vrot.slane %v235, 2
    %v237 = vadd.f32 %v235, %v236
    %v238 = vrot.slane %v237, 1
    %v239 = vadd.f32 %v237, %v238
    %v240 = vmul.f32 %v239, 0.125
    %v241 = vmul.f32 %v232, %v232
    %v242 = vsub.f32 %v240, %v241
    %v243 = vmax.f32 %v242, 0.0
    %v244 = vsub.f32 %v225, %v232
    %v245 = vadd.f32 %v243, 1e-05
    %v246 = vrsqrt.pop %v245
    %v247 = vmul.f32 %v246, %v245
    %v248 = vmul.f32 %v247, %v246
    %v249 = vmul.f32 0.5, %v248
    %v250 = vsub.f32 1.5, %v249
    %v251 = vmul.f32 %v246, %v250
    %vm252 = vweird.f32 %v245
    %vm253 = vweird.f32 %v246
    %vm254 = vmor %vm252, %vm253
    %v255 = vsel %vm254, %v246, %v251
    %v256 = vmul.f32 %v244, %v255
    %v257 = vperm.slane %v185, 0
    %v258 = vmul.f32 %v256, %v257
    %v259 = vperm.slane %v186, 0
    %v260 = vadd.f32 %v258, %v259
    %v261 = vld [vmem:[%s2 + $0x9] sm:$0x1]
    %s262 = scalar_lea.vmem [#allocation2], 384
    %v263 = vld [vmem:[%s262] sm:$0xff]
    %v264 = vld [vmem:[%s262 + $0x8] sm:$0xff]
    %v265 = vld [vmem:[%s262 + $0x10] sm:$0xff]
    %v266 = vld [vmem:[%s262 + $0x18] sm:$0xff]
    %v267 = vld [vmem:[%s262 + $0x20] sm:$0xff]
    %v268 = vld [vmem:[%s262 + $0x28] sm:$0xff]
    %v269 = vld [vmem:[%s262 + $0x30] sm:$0xff]
    %v270 = vld [vmem:[%s262 + $0x38] sm:$0xff]
    %v271 = vld [vmem:[%s262 + $0x40] sm:$0xff]
    %v272 = vld [vmem:[%s262 + $0x48] sm:$0xff]
    %v273 = vld [vmem:[%s262 + $0x50] sm:$0xff]
    %v274 = vld [vmem:[%s262 + $0x58] sm:$0xff]
    %v275 = vld [vmem:[%s262 + $0x60] sm:$0xff]
    %v276 = vld [vmem:[%s262 + $0x68] sm:$0xff]
    %v277 = vld [vmem:[%s262 + $0x70] sm:$0xff]
    %v278 = vld [vmem:[%s262 + $0x78] sm:$0xff]
    %v279 = vperm.slane %v261, 0
    %280 = vmatpush.msra.mxu0 %v278
    %281 = vmatpush.msra.mxu0 %v277
    %282 = vmatpush.msra.mxu0 %v276
    %283 = vmatpush.msra.mxu0 %v275
    %284 = vmatpush.msra.mxu0 %v274
    %285 = vmatpush.msra.mxu0 %v273
    %286 = vmatpush.msra.mxu0 %v272
    %287 = vmatpush.msra.mxu0 %v271
    %288 = vmatpush.msra.mxu0 %v270
    %289 = vmatpush.msra.mxu0 %v269
    %290 = vmatpush.msra.mxu0 %v268
    %291 = vmatpush.msra.mxu0 %v267
    %292 = vmatpush.msra.mxu0 %v266
    %293 = vmatpush.msra.mxu0 %v265
    %294 = vmatpush.msra.mxu0 %v264
    %295 = vmatpush.msra.mxu0 %v263
    %296 = vmatmul.f32.gmra.mxu0 %v260
    %v297 = vpop.f32.mrf.mxu0
    %v298 = vadd.f32 %v279, %v297
    %299 = vdwg.mxu0
    %300 = vst [vmem:[%s3] sm:$0xff] %v298
    // Predicated region
    $region18: #{my_model1_forward.1} parent=1 // pred_check
      _
    $region19: #{my_model1_forward.1} parent=1 // pred_check_branch
      %302 = sbr.rel (0) target = $region21
    $region20: #{my_model1_forward.1} parent=1 // pred_region
      _
    $region21: #{my_model1_forward.1} parent=1 // pred_fallthru
      _
    // Predicated region
    $region22: #{my_model1_forward.1} parent=1 // pred_check
      _
    $region23: #{my_model1_forward.1} parent=1 // pred_check_branch
      %304 = sbr.rel (0) target = $region25
    $region24: #{my_model1_forward.1} parent=1 // pred_region
      _
    $region25: #{my_model1_forward.1} parent=1 // pred_fallthru
      _
    %305 = vsyncpa [#allocation3], 1

</llo_original>
